<compile_context>
chip_gen: v5e
topology: v5e:2x2
jax: 0.10.0
libtpu: 0.0.40
codegen_flags: <defaults>
</compile_context>

<pallas_src>
import jax
import jax.numpy as jnp
from jax.experimental import pallas as pl
from jax.experimental.pallas import tpu as pltpu


def _center_error_kernel(l_ref, u_ref, c_ref, e_ref):
    # l_ref, u_ref : (TB, TD) lane/sublane-dense blocks of the flattened bounds
    # c_ref, e_ref : (TB, TD) outputs (center, error radius)
    l = l_ref[...]
    u = u_ref[...]
    c_ref[...] = (l + u) * 0.5     # Interval.update_lu: center
    e_ref[...] = (u - l) * 0.5     # Interval.update_lu: error radius


def _pick_tiles(N, D, dtype):
    # Sublane tile: full N if small, else a multiple of 8 (16 for packed bf16).
    sub = 16 if jnp.dtype(dtype).itemsize < 4 else 8
    tb_target = 64
    if N <= tb_target:
        TB = N                      # equal-to-full-dim satisfies the tiling rule
    else:
        TB = tb_target - (tb_target % sub)
    # Lane tile: full D if small, else a multiple of 128 (~2K lanes per block).
    td_target = 2048
    TD = D if D <= td_target else td_target
    return TB, TD


def interval_flatten(l, u):
    """Pallas implementation of Interval_Flatten.forward for Interval inputs.

    Args:
      l, u: lower / upper bounds, shape (N, C, H, W) (or any (N, ...)), same dtype.
    Returns:
      (l_flat, u_flat, c, e) each of shape (N, prod(rest)).
    """
    assert l.shape == u.shape and l.dtype == u.dtype
    N = l.shape[0]
    D = 1
    for s in l.shape[1:]:
        D *= s

    # Flatten in the wrapper: contiguous row-major reshape == torch .view(N, -1)
    # and is a free metadata op (no in-kernel relayout).
    l_flat = l.reshape(N, D)
    u_flat = u.reshape(N, D)

    TB, TD = _pick_tiles(N, D, l.dtype)
    grid = (pl.cdiv(N, TB), pl.cdiv(D, TD))

    spec = pl.BlockSpec((TB, TD), lambda i, j: (i, j))
    out_sds = jax.ShapeDtypeStruct((N, D), l.dtype)

    itemsize = jnp.dtype(l.dtype).itemsize
    cost = pl.CostEstimate(
        flops=2 * N * D,
        transcendentals=0,
        bytes_accessed=4 * N * D * itemsize,   # 2 reads + 2 writes
    )

    c, e = pl.pallas_call(
        _center_error_kernel,
        out_shape=(out_sds, out_sds),
        grid_spec=pltpu.PrefetchScalarGridSpec(
            num_scalar_prefetch=0,
            grid=grid,
            in_specs=[spec, spec],
            out_specs=[spec, spec],
        ),
        compiler_params=pltpu.CompilerParams(
            dimension_semantics=("parallel", "parallel"),
        ),
        cost_estimate=cost,
    )(l_flat, u_flat)

    # l_flat / u_flat are identity views of the inputs; no kernel traffic needed.
    return l_flat, u_flat, c, e


if __name__ == "__main__":
    key = jax.random.PRNGKey(0)
    k1, k2 = jax.random.split(key)

    N, C, H, W = 2, 4, 16, 16
    # Build a valid interval: l <= u.
    center = jax.random.normal(k1, (N, C, H, W), dtype=jnp.float32)
    radius = jnp.abs(jax.random.normal(k2, (N, C, H, W), dtype=jnp.float32))
    l = center - radius
    u = center + radius

    l_flat, u_flat, c, e = interval_flatten(l, u)
    jax.block_until_ready((l_flat, u_flat, c, e))

    # Reference check against plain-JAX semantics of the PyTorch module.
    l_ref = l.reshape(N, -1)
    u_ref = u.reshape(N, -1)
    c_ref = (l_ref + u_ref) * 0.5
    e_ref = (u_ref - l_ref) * 0.5
    assert l_flat.shape == (N, C * H * W)
    assert jnp.allclose(l_flat, l_ref, atol=1e-6)
    assert jnp.allclose(u_flat, u_ref, atol=1e-6)
    assert jnp.allclose(c, c_ref, atol=1e-6)
    assert jnp.allclose(e, e_ref, atol=1e-6)

    print("KERNEL_OK")
</pallas_src>

<mosaic_0001>
module attributes {stable_mosaic.version = 11 : i64} {
  func.func @_center_error_kernel(%arg0: i32, %arg1: i32, %arg2: memref<2x1024xf32, #tpu.memory_space<vmem>>, %arg3: memref<2x1024xf32, #tpu.memory_space<vmem>>, %arg4: memref<2x1024xf32, #tpu.memory_space<vmem>>, %arg5: memref<2x1024xf32, #tpu.memory_space<vmem>>) attributes {dimension_semantics = [#tpu.dimension_semantics<parallel>, #tpu.dimension_semantics<parallel>], iteration_bounds = array<i64: 1, 1>, scalar_prefetch = 0 : i64, scratch_operands = 0 : i64, tpu.core_type = #tpu.core_type<tc>, window_params = [{transform_indices = @transform_0, window_bounds = array<i64: 2, 1024>}, {transform_indices = @transform_1, window_bounds = array<i64: 2, 1024>}, {transform_indices = @transform_2, window_bounds = array<i64: 2, 1024>}, {transform_indices = @transform_3, window_bounds = array<i64: 2, 1024>}]} {
    %c0 = arith.constant 0 : index
    %c0_0 = arith.constant 0 : index
    %0 = vector.load %arg2[%c0, %c0_0] : memref<2x1024xf32, #tpu.memory_space<vmem>>, vector<2x1024xf32>
    %c0_1 = arith.constant 0 : index
    %c0_2 = arith.constant 0 : index
    %1 = vector.load %arg3[%c0_1, %c0_2] : memref<2x1024xf32, #tpu.memory_space<vmem>>, vector<2x1024xf32>
    %2 = arith.addf %0, %1 : vector<2x1024xf32>
    %cst = arith.constant 5.000000e-01 : f32
    %3 = vector.broadcast %cst : f32 to vector<2x1024xf32>
    %4 = arith.mulf %2, %3 : vector<2x1024xf32>
    %c0_3 = arith.constant 0 : index
    %c0_4 = arith.constant 0 : index
    %5 = vector.load %arg4[%c0_3, %c0_4] : memref<2x1024xf32, #tpu.memory_space<vmem>>, vector<2x1024xf32>
    tpu.vector_store %arg4[%c0_3, %c0_4], %4 {strides = array<i32>} : memref<2x1024xf32, #tpu.memory_space<vmem>>, vector<2x1024xf32>,
    %6 = arith.subf %1, %0 : vector<2x1024xf32>
    %cst_5 = arith.constant 5.000000e-01 : f32
    %7 = vector.broadcast %cst_5 : f32 to vector<2x1024xf32>
    %8 = arith.mulf %6, %7 : vector<2x1024xf32>
    %c0_6 = arith.constant 0 : index
    %c0_7 = arith.constant 0 : index
    %9 = vector.load %arg5[%c0_6, %c0_7] : memref<2x1024xf32, #tpu.memory_space<vmem>>, vector<2x1024xf32>
    tpu.vector_store %arg5[%c0_6, %c0_7], %8 {strides = array<i32>} : memref<2x1024xf32, #tpu.memory_space<vmem>>, vector<2x1024xf32>,
    return
  }
  func.func @transform_0(%arg0: i32, %arg1: i32) -> (i32, i32) {
    %c0_i32 = arith.constant 0 : i32
    return %arg0, %arg1 : i32, i32
  }
  func.func @transform_1(%arg0: i32, %arg1: i32) -> (i32, i32) {
    %c0_i32 = arith.constant 0 : i32
    return %arg0, %arg1 : i32, i32
  }
  func.func @transform_2(%arg0: i32, %arg1: i32) -> (i32, i32) {
    %c0_i32 = arith.constant 0 : i32
    return %arg0, %arg1 : i32, i32
  }
  func.func @transform_3(%arg0: i32, %arg1: i32) -> (i32, i32) {
    %c0_i32 = arith.constant 0 : i32
    return %arg0, %arg1 : i32, i32
  }
}

</mosaic_0001>

<llo_original>
// kernel: tpu_custom_call.1
$region0: #{tpu_custom_call.1}
  #allocation0 [shape = 'u32[]', space=smem, size = 0x4, offset = 0x4, fixed_abs, tag = 'smem constant byte address 0x4 - core index']
  #allocation1 [shape = 'u32[72,128]{1,0:T(1,128)}', space=vmem, size = 0x9000, scoped, tag = 'internal scratch']
  %s0 = inlined_call_operand.hbm [shape: f32[2,1024], index: 0, kind: input, shape index: {}]
  %s1 = inlined_call_operand.hbm [shape: f32[2,1024], index: 1, kind: input, shape index: {}]
  %s2 = inlined_call_operand.hbm [shape: f32[2,1024], index: 2, kind: output, shape index: {0}]
  %s3 = inlined_call_operand.hbm [shape: f32[2,1024], index: 3, kind: output, shape index: {1}]
  %4 = xla_tuple %s2, %s3
  %s5 = sld [smem:[#allocation0]]
  $region34: #{tpu_custom_call.1} parent=0
    _
  %s7 = ssub.s32 1, %s5
  %s8 = scalar_select 0, %s7, %s5
  $region1: #{tpu_custom_call.1} parent=0
    #allocation2 [shape = 'u8[8192]{0}', space=vmem, size = 0x2000, scoped, tag = 'input window, operand 0, single buffered']
    #allocation3 [shape = 's32[1]{0}', space=sflag, size = 0x4, scoped, tag = 'scoped memory for tpu_custom_call.1']
    #allocation4 [shape = 's32[1]{0}', space=sflag, size = 0x4, scoped, tag = 'scoped memory for tpu_custom_call.1']
    #allocation5 [shape = 'u8[8192]{0}', space=vmem, size = 0x2000, scoped, tag = 'input window, operand 1, single buffered']
    #allocation6 [shape = 's32[1]{0}', space=sflag, size = 0x4, scoped, tag = 'scoped memory for tpu_custom_call.1']
    #allocation7 [shape = 'u8[8192]{0}', space=vmem, size = 0x2000, scoped, tag = 'output window, operand 0, single buffered']
    #allocation8 [shape = 'u8[8192]{0}', space=vmem, size = 0x2000, scoped, tag = 'output window, operand 1, single buffered']
    #allocation9 [shape = 's32[1]{0}', space=sflag, size = 0x4, scoped, tag = 'scoped memory for tpu_custom_call.1']
    %9 = vsyncpa [#allocation3], 0
    %10 = vsyncpa [#allocation6], 0
    %11 = vsyncpa [#allocation4], 0
    %12 = vsyncpa [#allocation9], 0
    // Predicated region
    $region2: #{tpu_custom_call.1} parent=1 // pred_check
      _
    $region3: #{tpu_custom_call.1} parent=1 // pred_check_branch
      %14 = sbr.rel (0) target = $region5
    $region4: #{tpu_custom_call.1} parent=1 // pred_region
      %16 = vsyncadd [#allocation3], 0
      %s18 = sshll.u32 %s0, 4
      %s19 = int_to_ptr.hbm [resolvable:$true] %s18
      %s20 = sshll.u32 [#allocation2], 4
      %s21 = int_to_ptr.vmem [resolvable:$true] %s20
      %23 = dma.hbm_to_vmem [thread:$0]  %s19, 256, %s21, [#allocation3]
    $region5: #{tpu_custom_call.1} parent=1 // pred_fallthru
      _
    // Predicated region
    $region6: #{tpu_custom_call.1} parent=1 // pred_check
      _
    $region7: #{tpu_custom_call.1} parent=1 // pred_check_branch
      %25 = sbr.rel (0) target = $region9
    $region8: #{tpu_custom_call.1} parent=1 // pred_region
      %27 = vsyncadd [#allocation6], 0
      %s29 = sshll.u32 %s1, 4
      %s30 = int_to_ptr.hbm [resolvable:$true] %s29
      %s31 = sshll.u32 [#allocation5], 4
      %s32 = int_to_ptr.vmem [resolvable:$true] %s31
      %34 = dma.hbm_to_vmem [thread:$0]  %s30, 256, %s32, [#allocation6]
    $region9: #{tpu_custom_call.1} parent=1 // pred_fallthru
      _
    // Predicated region
    $region10: #{tpu_custom_call.1} parent=1 // pred_check
      _
    $region11: #{tpu_custom_call.1} parent=1 // pred_check_branch
      %36 = sbr.rel (0) target = $region13
    $region12: #{tpu_custom_call.1} parent=1 // pred_region
      %38 = dma.done [#allocation3], 256
    $region13: #{tpu_custom_call.1} parent=1 // pred_fallthru
      _
    // Predicated region
    $region14: #{tpu_custom_call.1} parent=1 // pred_check
      _
    $region15: #{tpu_custom_call.1} parent=1 // pred_check_branch
      %40 = sbr.rel (0) target = $region17
    $region16: #{tpu_custom_call.1} parent=1 // pred_region
      %42 = dma.done [#allocation6], 256
    $region17: #{tpu_custom_call.1} parent=1 // pred_fallthru
      _
    %v43 = vld [vmem:[#allocation2] sm:$0xff]
    %v44 = vld [vmem:[#allocation2 + $0x8] sm:$0xff]
    %v45 = vld [vmem:[#allocation5] sm:$0xff]
    %v46 = vld [vmem:[#allocation5 + $0x8] sm:$0xff]
    %v47 = vadd.f32 %v43, %v45
    %v48 = vadd.f32 %v44, %v46
    %v49 = vmul.f32 %v47, 0.5
    %v50 = vmul.f32 %v48, 0.5
    %51 = vst [vmem:[#allocation7] sm:$0xff] %v49
    %52 = vst [vmem:[#allocation7 + $0x8] sm:$0xff] %v50
    %v53 = vsub.f32 %v45, %v43
    %v54 = vsub.f32 %v46, %v44
    %v55 = vmul.f32 %v53, 0.5
    %v56 = vmul.f32 %v54, 0.5
    %57 = vst [vmem:[#allocation8] sm:$0xff] %v55
    %58 = vst [vmem:[#allocation8 + $0x8] sm:$0xff] %v56
    // Predicated region
    $region18: #{tpu_custom_call.1} parent=1 // pred_check
      _
    $region19: #{tpu_custom_call.1} parent=1 // pred_check_branch
      %60 = sbr.rel (0) target = $region21
    $region20: #{tpu_custom_call.1} parent=1 // pred_region
      %62 = vsyncadd [#allocation4], 0
      %s64 = sshll.u32 [#allocation7], 4
      %s65 = int_to_ptr.vmem [resolvable:$true] %s64
      %s66 = sshll.u32 %s2, 4
      %s67 = int_to_ptr.hbm [resolvable:$true] %s66
      %69 = dma.vmem_to_hbm [thread:$0]  %s65, 256, %s67, [#allocation4]
    $region21: #{tpu_custom_call.1} parent=1 // pred_fallthru
      _
    // Predicated region
    $region22: #{tpu_custom_call.1} parent=1 // pred_check
      _
    $region23: #{tpu_custom_call.1} parent=1 // pred_check_branch
      %71 = sbr.rel (0) target = $region25
    $region24: #{tpu_custom_call.1} parent=1 // pred_region
      %73 = vsyncadd [#allocation9], 0
      %s75 = sshll.u32 [#allocation8], 4
      %s76 = int_to_ptr.vmem [resolvable:$true] %s75
      %s77 = sshll.u32 %s3, 4
      %s78 = int_to_ptr.hbm [resolvable:$true] %s77
      %80 = dma.vmem_to_hbm [thread:$0]  %s76, 256, %s78, [#allocation9]
    $region25: #{tpu_custom_call.1} parent=1 // pred_fallthru
      _
    // Predicated region
    $region26: #{tpu_custom_call.1} parent=1 // pred_check
      _
    $region27: #{tpu_custom_call.1} parent=1 // pred_check_branch
      %82 = sbr.rel (0) target = $region29
    $region28: #{tpu_custom_call.1} parent=1 // pred_region
      %84 = dma.done [#allocation4], 256
    $region29: #{tpu_custom_call.1} parent=1 // pred_fallthru
      _
    // Predicated region
    $region30: #{tpu_custom_call.1} parent=1 // pred_check
      _
    $region31: #{tpu_custom_call.1} parent=1 // pred_check_branch
      %86 = sbr.rel (0) target = $region33
    $region32: #{tpu_custom_call.1} parent=1 // pred_region
      %88 = dma.done [#allocation9], 256
    $region33: #{tpu_custom_call.1} parent=1 // pred_fallthru
      _
    %89 = vsyncpa [#allocation3], 1
    %90 = vsyncpa [#allocation6], 1
    %91 = vsyncpa [#allocation4], 1
    %92 = vsyncpa [#allocation9], 1

</llo_original>
